<compile_context>
chip_gen: v7x
topology: tpu7x:2x2x1
jax: 0.10.0
libtpu: 0.0.40
codegen_flags: <defaults>
</compile_context>

<pallas_src>
import functools

import jax
import jax.numpy as jnp
from jax.experimental import pallas as pl
from jax.experimental.pallas import tpu as pltpu


_MXU_RANK_THRESHOLD = 2  # rank <= 2 -> VPU broadcast outer product, else MXU


def _lora_kernel(b_ref, a_ref, w_ref, o_ref, *, scale, rank):
    """o = w + (B @ A) * scale on one (tm, tn) tile."""
    # Fold the 1/rank scale into the tiny (tm, rank) tile (cheapest place).
    b = b_ref[...].astype(jnp.float32) * scale
    a = a_ref[...].astype(jnp.float32)
    if rank <= _MXU_RANK_THRESHOLD:
        # Tiny contraction dim: VPU broadcast outer product.
        delta = b[:, 0:1] * a[0:1, :]
        for r in range(1, rank):
            delta += b[:, r:r + 1] * a[r:r + 1, :]
    else:
        # MXU path. HIGHEST precision keeps f32 inputs exact; the extra MXU
        # passes are free in this memory-bound kernel.
        delta = jnp.dot(b, a, preferred_element_type=jnp.float32,
                        precision=jax.lax.Precision.HIGHEST)
    if o_ref.dtype == jnp.float32:
        o_ref[...] = w_ref[...] + delta
    else:
        # Accumulate in f32, cast once (matches the reference add-then-cast).
        o_ref[...] = (w_ref[...].astype(jnp.float32) + delta).astype(o_ref.dtype)


def _vmem_budgets():
    """(streamed working-set budget, vmem_limit cap) for this TPU generation."""
    cap = 64 << 20
    try:
        info = pltpu.get_tpu_info()
        cap = int(getattr(info, "vmem_capacity_bytes", cap))
    except Exception:
        pass
    if cap >= (96 << 20):           # v5e / v6e: 128 MiB physical VMEM
        return 64 << 20, 100 << 20
    return 36 << 20, 48 << 20       # v7x: 64 MiB physical per TensorCore


def _choose_tiles(dim_in, dim_out, itemsize, budget_bytes):
    """Pick (tm, tn) so streamed tiles fit the budget and stores stay lane-dense."""
    sublane = 8 if itemsize >= 4 else (16 if itemsize == 2 else 32)
    # base tile + out tile (each double-buffered) + one f32 delta tile headroom.
    bytes_per_elem = 4 * itemsize + 4

    tn = dim_out
    tm = max(1, budget_bytes // max(1, tn * bytes_per_elem))

    if tm < sublane and dim_out > 128:
        # Very wide rows (e.g. vocab projections): tile the lane dim too,
        # keeping output blocks multiples of 128 lanes (unmasked stores).
        tm = min(dim_in, max(64, sublane))
        tn = (budget_bytes // max(1, tm * bytes_per_elem)) // 128 * 128
        tn = int(min(max(tn, 128), dim_out))

    # Keep >= 4 row stripes: shards across v7x's 2 TensorCores and gives the
    # pipeline DMA/compute overlap on every generation.
    if dim_in >= 4 * sublane:
        tm = min(tm, -(-dim_in // 4))

    if tm >= dim_in:
        tm = dim_in                       # full dim -> always a legal block
    elif tm >= sublane:
        tm = (tm // sublane) * sublane    # respect sublane packing granule
    tm = max(1, min(tm, dim_in))
    return int(tm), int(tn)


def simple_lora_forward(base_weight, B_weight, A_weight, *, rank, enable=True):
    """out = base_weight + (B_weight @ A_weight).reshape(base_weight.shape) / rank"""
    if not enable:
        return base_weight

    dim_in, r = B_weight.shape
    r2, dim_out = A_weight.shape
    assert r == r2 == rank
    assert base_weight.size == dim_in * dim_out
    base2d = base_weight.reshape(dim_in, dim_out)

    scale = 1.0 / rank
    itemsize = jnp.dtype(base_weight.dtype).itemsize
    stream_budget, cap_limit = _vmem_budgets()
    tm, tn = _choose_tiles(dim_in, dim_out, itemsize, stream_budget)
    grid_m = pl.cdiv(dim_in, tm)
    grid_n = pl.cdiv(dim_out, tn)

    # Explicit VMEM limit: A (double-buffered, tiny) + streamed B/base/out +
    # one f32 delta tile, with headroom, clamped to the per-generation cap.
    a_bytes = 2 * rank * tn * jnp.dtype(A_weight.dtype).itemsize
    b_bytes = 2 * tm * rank * jnp.dtype(B_weight.dtype).itemsize
    stream_bytes = 2 * 2 * tm * tn * itemsize          # base + out, double-buffered
    delta_bytes = tm * tn * 4                          # f32 delta temp
    need = a_bytes + b_bytes + stream_bytes + delta_bytes
    vmem_limit = min(max(int(1.25 * need) + (2 << 20), 32 << 20), cap_limit)

    cost = pl.CostEstimate(
        flops=2 * dim_in * dim_out * rank + dim_in * dim_out,
        transcendentals=0,
        bytes_accessed=2 * dim_in * dim_out * itemsize
        + dim_in * rank * jnp.dtype(B_weight.dtype).itemsize
        + rank * dim_out * jnp.dtype(A_weight.dtype).itemsize,
    )

    out2d = pl.pallas_call(
        functools.partial(_lora_kernel, scale=scale, rank=rank),
        out_shape=jax.ShapeDtypeStruct((dim_in, dim_out), base_weight.dtype),
        grid_spec=pltpu.PrefetchScalarGridSpec(
            num_scalar_prefetch=0,
            grid=(grid_m, grid_n),
            in_specs=[
                # B row stripe: (tm, rank); rank is the full last dim.
                pl.BlockSpec((tm, rank), lambda i, j: (i, 0)),
                # A: resident (constant index) when tn == dim_out, else a
                # lane-dense (rank, tn) column block.
                pl.BlockSpec((rank, tn), lambda i, j: (0, j)),
                # Base tile, lane-dense (tn is dim_out or a multiple of 128).
                pl.BlockSpec((tm, tn), lambda i, j: (i, j)),
            ],
            out_specs=pl.BlockSpec((tm, tn), lambda i, j: (i, j)),
        ),
        compiler_params=pltpu.CompilerParams(
            dimension_semantics=("parallel", "parallel"),
            vmem_limit_bytes=vmem_limit),
        cost_estimate=cost,
        # TODO(synk): optionally pass input_output_aliases={2: 0} when the
        # caller allows overwriting base_weight in place.
    )(B_weight, A_weight, base2d)

    return out2d.reshape(base_weight.shape)


def _reference(base_weight, B_weight, A_weight, rank):
    return base_weight + (B_weight @ A_weight).reshape(base_weight.shape) * (1.0 / rank)


if __name__ == "__main__":
    key = jax.random.PRNGKey(0)

    # Case 1: module-style init (A ~ N(0,1), B = zeros), rank=1 -> VPU path.
    dim_in, dim_out, rank = 32, 128, 1
    k_a, k_w, key = jax.random.split(key, 3)
    A1 = jax.random.normal(k_a, (rank, dim_out), dtype=jnp.float32)
    B1 = jnp.zeros((dim_in, rank), dtype=jnp.float32)
    W1 = jax.random.normal(k_w, (dim_in, dim_out), dtype=jnp.float32)
    out1 = jax.block_until_ready(simple_lora_forward(W1, B1, A1, rank=rank))
    ref1 = _reference(W1, B1, A1, rank)
    assert out1.shape == W1.shape and out1.dtype == W1.dtype
    assert jnp.allclose(out1, ref1, atol=1e-5, rtol=1e-5)

    # Case 2: nontrivial B, rank=4 -> MXU path (f32, HIGHEST precision).
    dim_in, dim_out, rank = 64, 256, 4
    k_a, k_b, k_w, key = jax.random.split(key, 4)
    A2 = jax.random.normal(k_a, (rank, dim_out), dtype=jnp.float32)
    B2 = jax.random.normal(k_b, (dim_in, rank), dtype=jnp.float32)
    W2 = jax.random.normal(k_w, (dim_in, dim_out), dtype=jnp.float32)
    out2 = jax.block_until_ready(simple_lora_forward(W2, B2, A2, rank=rank))
    ref2 = _reference(W2, B2, A2, rank)
    assert jnp.allclose(out2, ref2, atol=1e-4, rtol=1e-4)

    # Case 3: rank=16 -> MXU path; HIGHEST precision keeps f32 parity.
    dim_in, dim_out, rank = 64, 256, 16
    k_a, k_b, k_w, key = jax.random.split(key, 4)
    A3 = jax.random.normal(k_a, (rank, dim_out), dtype=jnp.float32)
    B3 = jax.random.normal(k_b, (dim_in, rank), dtype=jnp.float32)
    W3 = jax.random.normal(k_w, (dim_in, dim_out), dtype=jnp.float32)
    out3 = jax.block_until_ready(simple_lora_forward(W3, B3, A3, rank=rank))
    ref3 = _reference(W3, B3, A3, rank)
    assert jnp.allclose(out3, ref3, atol=1e-4, rtol=1e-4)

    # Case 4: bf16 weights (f32 accumulate inside the kernel, cast once).
    dim_in, dim_out, rank = 32, 128, 4
    k_a, k_b, k_w, key = jax.random.split(key, 4)
    A4 = jax.random.normal(k_a, (rank, dim_out), dtype=jnp.bfloat16)
    B4 = jax.random.normal(k_b, (dim_in, rank), dtype=jnp.bfloat16)
    W4 = jax.random.normal(k_w, (dim_in, dim_out), dtype=jnp.bfloat16)
    out4 = jax.block_until_ready(simple_lora_forward(W4, B4, A4, rank=rank))
    ref4 = _reference(W4, B4, A4, rank)
    assert out4.dtype == W4.dtype
    assert jnp.allclose(out4.astype(jnp.float32), ref4.astype(jnp.float32),
                        atol=5e-2, rtol=5e-2)

    # enable=False passthrough.
    out5 = simple_lora_forward(W1, B1, A1, rank=1, enable=False)
    assert out5 is W1

    print("KERNEL_OK")
</pallas_src>

<mosaic_0001>
module attributes {stable_mosaic.version = 11 : i64} {
  func.func @_lora_kernel(%arg0: i32, %arg1: i32, %arg2: memref<8x1xf32, #tpu.memory_space<vmem>>, %arg3: memref<1x128xf32, #tpu.memory_space<vmem>>, %arg4: memref<8x128xf32, #tpu.memory_space<vmem>>, %arg5: memref<8x128xf32, #tpu.memory_space<vmem>>) attributes {dimension_semantics = [#tpu.dimension_semantics<parallel>, #tpu.dimension_semantics<parallel>], iteration_bounds = array<i64: 4, 1>, scalar_prefetch = 0 : i64, scratch_operands = 0 : i64, tpu.core_type = #tpu.core_type<tc>, window_params = [{transform_indices = @transform_0, window_bounds = array<i64: 8, 1>}, {transform_indices = @transform_1, window_bounds = array<i64: 1, 128>}, {transform_indices = @transform_2, window_bounds = array<i64: 8, 128>}, {transform_indices = @transform_3, window_bounds = array<i64: 8, 128>}]} {
    %c0 = arith.constant 0 : index
    %c0_0 = arith.constant 0 : index
    %0 = vector.load %arg2[%c0, %c0_0] : memref<8x1xf32, #tpu.memory_space<vmem>>, vector<8x1xf32>
    %cst = arith.constant 1.000000e+00 : f32
    %1 = vector.broadcast %cst : f32 to vector<8x1xf32>
    %2 = arith.mulf %0, %1 : vector<8x1xf32>
    %c0_1 = arith.constant 0 : index
    %c0_2 = arith.constant 0 : index
    %3 = vector.load %arg3[%c0_1, %c0_2] : memref<1x128xf32, #tpu.memory_space<vmem>>, vector<1x128xf32>
    %4 = vector.broadcast %2 : vector<8x1xf32> to vector<8x128xf32>
    %5 = vector.broadcast %3 : vector<1x128xf32> to vector<8x128xf32>
    %6 = arith.mulf %4, %5 : vector<8x128xf32>
    %c0_3 = arith.constant 0 : index
    %c0_4 = arith.constant 0 : index
    %7 = vector.load %arg4[%c0_3, %c0_4] : memref<8x128xf32, #tpu.memory_space<vmem>>, vector<8x128xf32>
    %8 = arith.addf %7, %6 : vector<8x128xf32>
    %c0_5 = arith.constant 0 : index
    %c0_6 = arith.constant 0 : index
    %9 = vector.load %arg5[%c0_5, %c0_6] : memref<8x128xf32, #tpu.memory_space<vmem>>, vector<8x128xf32>
    tpu.vector_store %arg5[%c0_5, %c0_6], %8 {strides = array<i32>} : memref<8x128xf32, #tpu.memory_space<vmem>>, vector<8x128xf32>,
    return
  }
  func.func @transform_0(%arg0: i32, %arg1: i32) -> (i32, i32) {
    %c0_i32 = arith.constant 0 : i32
    %c0_i32_0 = arith.constant 0 : i32
    return %arg0, %c0_i32 : i32, i32
  }
  func.func @transform_1(%arg0: i32, %arg1: i32) -> (i32, i32) {
    %c0_i32 = arith.constant 0 : i32
    %c0_i32_0 = arith.constant 0 : i32
    return %c0_i32, %arg1 : i32, i32
  }
  func.func @transform_2(%arg0: i32, %arg1: i32) -> (i32, i32) {
    %c0_i32 = arith.constant 0 : i32
    return %arg0, %arg1 : i32, i32
  }
  func.func @transform_3(%arg0: i32, %arg1: i32) -> (i32, i32) {
    %c0_i32 = arith.constant 0 : i32
    return %arg0, %arg1 : i32, i32
  }
}

</mosaic_0001>

<llo_original>
// kernel: tpu_custom_call.1
$region0: #{tpu_custom_call.1}
  #allocation0 [shape = 'u32[]', space=smem, size = 0x4, offset = 0x4, fixed_abs, tag = 'smem constant byte address 0x4 - core index']
  #allocation1 [shape = 'u32[144,128]{1,0:T(1,128)}', space=vmem, size = 0x12000, scoped, tag = 'internal scratch']
  %s0 = inlined_call_operand.vmem [shape: f32[32,1], index: 0, kind: input, shape index: {}]
  %s1 = inlined_call_operand.vmem [shape: f32[1,128], index: 1, kind: input, shape index: {}]
  %s2 = inlined_call_operand.vmem [shape: f32[32,128], index: 2, kind: input, shape index: {}]
  %s3 = inlined_call_operand.hbm [shape: f32[32,128], index: 3, kind: output, shape index: {}]
  %s4 = sld [smem:[#allocation0]]
  $region45: #{tpu_custom_call.1} parent=0
    _
  %s6 = ssub.s32 1, %s4
  %s7 = scalar_select 0, %s6, %s4
  $region1: #{tpu_custom_call.1} parent=0
    #allocation2 [shape = 'u8[8192]{0}', space=vmem, size = 0x2000, scoped, tag = 'output window, operand 0']
    #allocation3 [shape = 's32[2]{0}', space=sflag, size = 0x8, scoped, tag = 'scoped memory for tpu_custom_call.1']
    %8 = vsyncpa [#allocation3], 0
    %s9 = scalar_lea.sflag [#allocation3], 1
    %10 = vsyncpa %s9, 0
    loop: start=0, step=1, limit=6
    $region2: #{tpu_custom_call.1} parent=1 // loop_pre_header
      _
    $region3: #{tpu_custom_call.1} parent=1 // loop_header
      %s12 = sphi 0, %s16
      %p13 = scmp.ge.s32.totalorder %s12, 6
      %s19 = sphi 0, %s31
      %s20 = sphi 0, %s27
      %s21 = sphi 0, %s19
      %s22 = sphi 0, %s20
      %s23 = sphi 0, %s21
      %s24 = sphi 0, %s22
      %s34 = sphi 0, %s36
      %s37 = sphi 0, %s34
      %s38 = sphi 0, %s37
      %s54 = sphi 0, %s38
      %s60 = sphi 0, %s62
      %s63 = sphi 0, %s60
      %s64 = sphi 0, %s63
      %s80 = sphi 0, %s64
      %s88 = sphi 0, %s90
      %s91 = sphi 0, %s88
      %s92 = sphi 0, %s91
      %s108 = sphi 0, %s92
      %s116 = sphi 0, %s118
      %s119 = sphi 0, %s116
      %s120 = sphi 0, %s119
      %s136 = sphi 0, %s120
    $region4: #{tpu_custom_call.1} parent=1 // loop_header_branch
      %15 = sbr.rel (%p13) target = $region8
    $region5: #{tpu_custom_call.1} parent=1 // loop_body
      %s17 = ssub.s32 %s12, 1
      %s18 = ssub.s32 %s12, 2
      %s25 = sadd.s32 1, %s20
      %p26 = scmp.ge.s32.totalorder %s25, 1
      %s27 = scalar_select %p26, 0, %s25
      %s28 = sadd.s32 1, %s19
      %s29 = scalar_select %p26, %s28, %s19
      %p30 = scmp.ge.s32.totalorder %s29, 4
      %s31 = scalar_select %p30, 0, %s29
      %s32 = ssub.s32 %s19, %s31
      %p33 = scmp.eq.s32.totalorder %s32, 0
      %s35 = sadd.s32 %s34, 1
      %s36 = scalar_select %p33, %s34, %s35
      %p39 = pneg %p33
      %p40 = scmp.eq.s32.totalorder %s12, 3
      %p41 = por %p39, %p40
      %p42 = scmp.ne.s32.totalorder %s34, %s37
      %p43 = scmp.eq.s32.totalorder %s12, 0
      %p44 = por %p42, %p43
      %p45 = scmp.ne.s32.totalorder %s34, %s37
      %p46 = scmp.eq.s32.totalorder %s17, 3
      %p47 = por %p45, %p46
      %p48 = scmp.ne.s32.totalorder %s37, %s38
      %p49 = scmp.eq.s32.totalorder %s17, 0
      %p50 = por %p48, %p49
      %p51 = scmp.ne.s32.totalorder %s37, %s38
      %p52 = scmp.eq.s32.totalorder %s18, 3
      %p53 = por %p51, %p52
      %p55 = scmp.ne.s32.totalorder %s38, %s54
      %p56 = scmp.eq.s32.totalorder %s18, 0
      %p57 = por %p55, %p56
      %s58 = ssub.s32 %s20, %s27
      %p59 = scmp.eq.s32.totalorder %s58, 0
      %s61 = sadd.s32 %s60, 1
      %s62 = scalar_select %p59, %s60, %s61
      %p65 = pneg %p59
      %p66 = scmp.eq.s32.totalorder %s12, 3
      %p67 = por %p65, %p66
      %p68 = scmp.ne.s32.totalorder %s60, %s63
      %p69 = scmp.eq.s32.totalorder %s12, 0
      %p70 = por %p68, %p69
      %p71 = scmp.ne.s32.totalorder %s60, %s63
      %p72 = scmp.eq.s32.totalorder %s17, 3
      %p73 = por %p71, %p72
      %p74 = scmp.ne.s32.totalorder %s63, %s64
      %p75 = scmp.eq.s32.totalorder %s17, 0
      %p76 = por %p74, %p75
      %p77 = scmp.ne.s32.totalorder %s63, %s64
      %p78 = scmp.eq.s32.totalorder %s18, 3
      %p79 = por %p77, %p78
      %p81 = scmp.ne.s32.totalorder %s64, %s80
      %p82 = scmp.eq.s32.totalorder %s18, 0
      %p83 = por %p81, %p82
      %s84 = ssub.s32 %s19, %s31
      %s85 = ssub.s32 %s20, %s27
      %s86 = sor.u32 %s84, %s85
      %p87 = scmp.eq.s32.totalorder %s86, 0
      %s89 = sadd.s32 %s88, 1
      %s90 = scalar_select %p87, %s88, %s89
      %p93 = pneg %p87
      %p94 = scmp.eq.s32.totalorder %s12, 3
      %p95 = por %p93, %p94
      %p96 = scmp.ne.s32.totalorder %s88, %s91
      %p97 = scmp.eq.s32.totalorder %s12, 0
      %p98 = por %p96, %p97
      %p99 = scmp.ne.s32.totalorder %s88, %s91
      %p100 = scmp.eq.s32.totalorder %s17, 3
      %p101 = por %p99, %p100
      %p102 = scmp.ne.s32.totalorder %s91, %s92
      %p103 = scmp.eq.s32.totalorder %s17, 0
      %p104 = por %p102, %p103
      %p105 = scmp.ne.s32.totalorder %s91, %s92
      %p106 = scmp.eq.s32.totalorder %s18, 3
      %p107 = por %p105, %p106
      %p109 = scmp.ne.s32.totalorder %s92, %s108
      %p110 = scmp.eq.s32.totalorder %s18, 0
      %p111 = por %p109, %p110
      %s112 = ssub.s32 %s19, %s31
      %s113 = ssub.s32 %s20, %s27
      %s114 = sor.u32 %s112, %s113
      %p115 = scmp.eq.s32.totalorder %s114, 0
      %s117 = sadd.s32 %s116, 1
      %s118 = scalar_select %p115, %s116, %s117
      %p121 = pneg %p115
      %p122 = scmp.eq.s32.totalorder %s12, 3
      %p123 = por %p121, %p122
      %p124 = scmp.ne.s32.totalorder %s116, %s119
      %p125 = scmp.eq.s32.totalorder %s12, 0
      %p126 = por %p124, %p125
      %p127 = scmp.ne.s32.totalorder %s116, %s119
      %p128 = scmp.eq.s32.totalorder %s17, 3
      %p129 = por %p127, %p128
      %p130 = scmp.ne.s32.totalorder %s119, %s120
      %p131 = scmp.eq.s32.totalorder %s17, 0
      %p132 = por %p130, %p131
      %p133 = scmp.ne.s32.totalorder %s119, %s120
      %p134 = scmp.eq.s32.totalorder %s18, 3
      %p135 = por %p133, %p134
      %p137 = scmp.ne.s32.totalorder %s120, %s136
      %p138 = scmp.eq.s32.totalorder %s18, 0
      %p139 = por %p137, %p138
      %p140 = scmp.le.s32.totalorder 1, %s12
      %p141 = scmp.lt.s32.totalorder %s12, 5
      %p142 = pnand %p140, %p141
      %p143 = pneg %p142
      // Predicated region
      $region9: #{tpu_custom_call.1} parent=5 // pred_check
        _
      $region10: #{tpu_custom_call.1} parent=5 // pred_check_branch
        %145 = sbr.rel (%p142) target = $region12
      $region11: #{tpu_custom_call.1} parent=5 // pred_region
        %s146 = ssub.s32 %s12, 1
        // Predicated region
        $region13: #{tpu_custom_call.1} parent=11 // pred_check
          %p147 = pneg %p76
        $region14: #{tpu_custom_call.1} parent=11 // pred_check_branch
          %149 = sbr.rel (%p147) target = $region16
        $region15: #{tpu_custom_call.1} parent=11 // pred_region
          %p150 = scmp.lt.s32.totalorder %s22, 0
          %s151 = scalar_select %p150, %s22, 0
          %s152 = scalar_lea.vmem %s1, %s151
        $region16: #{tpu_custom_call.1} parent=11 // pred_fallthru
          _
      $region12: #{tpu_custom_call.1} parent=5 // pred_fallthru
        _
      %p153 = scmp.lt.s32.totalorder %s12, 4
      // Predicated region
      $region17: #{tpu_custom_call.1} parent=5 // pred_check
        %p154 = pneg %p153
      $region18: #{tpu_custom_call.1} parent=5 // pred_check_branch
        %156 = sbr.rel (%p154) target = $region20
      $region19: #{tpu_custom_call.1} parent=5 // pred_region
        // Predicated region
        $region21: #{tpu_custom_call.1} parent=19 // pred_check
          %p157 = pneg %p44
        $region22: #{tpu_custom_call.1} parent=19 // pred_check_branch
          %159 = sbr.rel (%p157) target = $region24
        $region23: #{tpu_custom_call.1} parent=19 // pred_region
          %p160 = scmp.lt.s32.totalorder %s19, 3
          %s161 = scalar_select %p160, %s19, 3
          %s162 = smul.addr %s161, 8
          %s163 = scalar_lea.vmem %s0, %s162
        $region24: #{tpu_custom_call.1} parent=19 // pred_fallthru
          _
        // Predicated region
        $region25: #{tpu_custom_call.1} parent=19 // pred_check
          %p164 = pneg %p98
        $region26: #{tpu_custom_call.1} parent=19 // pred_check_branch
          %166 = sbr.rel (%p164) target = $region28
        $region27: #{tpu_custom_call.1} parent=19 // pred_region
          %p167 = scmp.lt.s32.totalorder %s19, 3
          %s168 = scalar_select %p167, %s19, 3
          %p169 = scmp.lt.s32.totalorder %s20, 0
          %s170 = scalar_select %p169, %s20, 0
          %s171 = sadd.s32 %s170, %s168
          %s172 = smul.addr %s171, 8
          %s173 = scalar_lea.vmem %s2, %s172
        $region28: #{tpu_custom_call.1} parent=19 // pred_fallthru
          _
      $region20: #{tpu_custom_call.1} parent=5 // pred_fallthru
        _
      %p174 = scmp.le.s32.totalorder 1, %s12
      %p175 = scmp.lt.s32.totalorder %s12, 5
      %p176 = pnand %p174, %p175
      %p177 = pneg %p176
      // Predicated region
      $region29: #{tpu_custom_call.1} parent=5 // pred_check
        _
      $region30: #{tpu_custom_call.1} parent=5 // pred_check_branch
        %179 = sbr.rel (%p176) target = $region32
      $region31: #{tpu_custom_call.1} parent=5 // pred_region
        %s180 = ssub.s32 %s12, 1
        %p181 = scmp.lt.s32.totalorder %s21, 3
        %s182 = scalar_select %p181, %s21, 3
        %s183 = smul.addr %s182, 8
        %s184 = scalar_lea.vmem %s0, %s183
        %p185 = pneg %p50
        %p186 = pneg %p47
        %p187 = scmp.lt.s32.totalorder %s22, 0
        %s188 = scalar_select %p187, %s22, 0
        %s189 = scalar_lea.vmem %s1, %s188
        %p190 = pneg %p76
        %p191 = pneg %p73
        %p192 = scmp.lt.s32.totalorder %s21, 3
        %s193 = scalar_select %p192, %s21, 3
        %p194 = scmp.lt.s32.totalorder %s22, 0
        %s195 = scalar_select %p194, %s22, 0
        %s196 = sadd.s32 %s195, %s193
        %s197 = smul.addr %s196, 8
        %s198 = scalar_lea.vmem %s2, %s197
        %p199 = pneg %p104
        %p200 = pneg %p101
        %p201 = pneg %p132
        %p202 = pneg %p129
        %s203 = sand.u32 %s119, 1
        %s204 = scalar_lea.sflag [#allocation3], %s203
        %s205 = sand.u32 %s119, 1
        %s206 = smul.addr %s205, 8
        %s207 = scalar_lea.vmem [#allocation2], %s206
        %p208 = scmp.lt.s32.totalorder %s21, 3
        %s209 = scalar_select %p208, %s21, 3
        %s210 = smul.addr %s209, 8
        %s211 = scalar_lea.vmem %s0, %s210
        %p212 = scmp.lt.s32.totalorder %s22, 0
        %s213 = scalar_select %p212, %s22, 0
        %s214 = scalar_lea.vmem %s1, %s213
        %p215 = scmp.lt.s32.totalorder %s21, 3
        %s216 = scalar_select %p215, %s21, 3
        %p217 = scmp.lt.s32.totalorder %s22, 0
        %s218 = scalar_select %p217, %s22, 0
        %s219 = sadd.s32 %s218, %s216
        %s220 = smul.addr %s219, 8
        %s221 = scalar_lea.vmem %s2, %s220
        %v222 = vld [vmem:[%s211] sm:$0xff]
        %v223 = vld [vmem:[%s214] sm:$0x1]
        %225 = vset.pattern.permute.xlu0 0
        %226 = vperm.xlu0 %225, %v222
        %v227 = vpop.permute.xlu0 %226
        %v230 = vlaneseq
        %v231 = vshrl.u32 %v230, 7
        %v232 = vsub.s32 0, %v231
        %v233 = vrot.slane %v223, %v232
        %v235 = vmul.f32 %v227, %v233
        %v236 = vld [vmem:[%s221] sm:$0xff]
        %v237 = vadd.f32 %v236, %v235
        %238 = vst [vmem:[%s207] sm:$0xff] %v237
        %s239 = sand.u32 %s119, 1
        %s240 = scalar_lea.sflag [#allocation3], %s239
        %s241 = sand.u32 %s119, 1
        %s242 = smul.addr %s241, 8
        %s243 = scalar_lea.vmem [#allocation2], %s242
        // Predicated region
        $region33: #{tpu_custom_call.1} parent=31 // pred_check
          %p244 = pneg %p129
        $region34: #{tpu_custom_call.1} parent=31 // pred_check_branch
          %246 = sbr.rel (%p244) target = $region36
        $region35: #{tpu_custom_call.1} parent=31 // pred_region
          %s248 = ssub.s32 128, 128
          %249 = vsyncadd %s240, %s248
          %s250 = sadd.s32 %s22, %s21
          %s251 = smul.addr %s250, 128
          %s252 = scalar_lea.hbm %s3, %s251
          %s254 = sshll.u32 %s243, 4
          %s255 = int_to_ptr.vmem [resolvable:$true] %s254
          %257 = dma.vmem_to_hbm [thread:$0]  %s255, 128, %s252, %s240
        $region36: #{tpu_custom_call.1} parent=31 // pred_fallthru
          _
      $region32: #{tpu_custom_call.1} parent=5 // pred_fallthru
        _
      %p258 = scmp.le.s32.totalorder 2, %s12
      // Predicated region
      $region37: #{tpu_custom_call.1} parent=5 // pred_check
        %p259 = pneg %p258
      $region38: #{tpu_custom_call.1} parent=5 // pred_check_branch
        %261 = sbr.rel (%p259) target = $region40
      $region39: #{tpu_custom_call.1} parent=5 // pred_region
        %s262 = ssub.s32 %s12, 2
        // Predicated region
        $region41: #{tpu_custom_call.1} parent=39 // pred_check
          %p263 = pneg %p135
        $region42: #{tpu_custom_call.1} parent=39 // pred_check_branch
          %265 = sbr.rel (%p263) target = $region44
        $region43: #{tpu_custom_call.1} parent=39 // pred_region
          %s266 = sand.u32 %s120, 1
          %s267 = scalar_lea.sflag [#allocation3], %s266
          %s268 = sand.u32 %s120, 1
          %s269 = smul.addr %s268, 8
          %s270 = scalar_lea.vmem [#allocation2], %s269
          %271 = dma.done %s267, 128
        $region44: #{tpu_custom_call.1} parent=39 // pred_fallthru
          _
      $region40: #{tpu_custom_call.1} parent=5 // pred_fallthru
        _
    $region6: #{tpu_custom_call.1} parent=1 // loop_footer
      %s16 = sadd.s32 1, %s12
    $region7: #{tpu_custom_call.1} parent=1 // loop_footer_branch
      %11 = sbr.rel target = $region3
    $region8: #{tpu_custom_call.1} parent=1 // loop_exit
      _
    %272 = vsyncpa [#allocation3], 1
    %s273 = scalar_lea.sflag [#allocation3], 1
    %274 = vsyncpa %s273, 1

</llo_original>
